<compile_context>
chip_gen: v6e
topology: v6e:2x2x1
jax: 0.10.0
libtpu: 0.0.40
codegen_flags: <defaults>
</compile_context>

<pallas_src>
import jax
import jax.numpy as jnp
from jax.experimental import pallas as pl
from jax.experimental.pallas import tpu as pltpu

LEAKY_SLOPE = 0.01          # nn.LeakyReLU() default negative_slope
LANE = 128                  # TPU lane width
SUBLANE = 8                 # fp32 sublane tile
TILE_B_DEFAULT = 1024       # rows per grid step for large batches


def _round_up(x, m):
    return (x + m - 1) // m * m


def _leaky_relu(x):
    return jnp.where(x >= 0, x, LEAKY_SLOPE * x)


def discriminator_kernel(x_ref, w0, w1, w2, w3, w4, w5, b_ref, o_ref):
    """One batch tile through the whole MLP: 6x (bf16 matmul -> fp32 bias + LeakyReLU)."""
    w_refs = (w0, w1, w2, w3, w4, w5)
    h = x_ref[...]                                        # bf16 [TILE_B, D_pad]
    for i, w_ref in enumerate(w_refs):
        out_w = w_ref.shape[1]
        acc = jnp.dot(h, w_ref[...], preferred_element_type=jnp.float32)
        acc = acc + b_ref[i:i + 1, :out_w]                # fp32 bias, broadcasts over rows
        acc = _leaky_relu(acc)
        if i + 1 < len(w_refs):
            h = acc.astype(jnp.bfloat16)                  # bf16 operand for next MXU pass
        else:
            o_ref[...] = acc.astype(o_ref.dtype)


def discriminator_forward(x, params, reverse=False, tile_b=None):
    """Forward pass of the Discriminator.

    `reverse` only flips gradients in the original module (GradReverse.forward
    is identity), so it is a forward no-op here.
    """
    # TODO(synk): wrap in jax.custom_vjp to reproduce GradReverse's (-1 * grad)
    # backward if this kernel is ever differentiated.
    del reverse
    B, D = x.shape
    assert len(params) == 6

    # Logical layer widths and their lane-padded (multiple-of-128) versions.
    dims = [params[0][0].shape[0]] + [w.shape[1] for w, _ in params]
    pad_dims = [_round_up(d, LANE) for d in dims]
    max_out = max(pad_dims[1:])

    # Zero-pad weights to lane-dense shapes, cast to bf16.
    w_padded = []
    for i, (w, _) in enumerate(params):
        wp = jnp.pad(w, ((0, pad_dims[i] - w.shape[0]),
                         (0, pad_dims[i + 1] - w.shape[1])))
        w_padded.append(wp.astype(jnp.bfloat16))

    # Pack all six biases into a single (8, max_out) fp32 block (one DMA).
    b_packed = jnp.zeros((SUBLANE, max_out), jnp.float32)
    for i, (_, b) in enumerate(params):
        b_packed = b_packed.at[i, :b.shape[-1]].set(
            b.reshape(-1).astype(jnp.float32))

    # Batch tiling: large tiles for big batches, one tile for small ones.
    if tile_b is None:
        tile_b = min(TILE_B_DEFAULT, _round_up(B, SUBLANE))
    tile_b = _round_up(tile_b, SUBLANE)
    b_pad = _round_up(B, tile_b)
    d_in_pad = pad_dims[0]
    d_out_pad = pad_dims[-1]

    x_pad = jnp.pad(x.astype(jnp.bfloat16), ((0, b_pad - B), (0, d_in_pad - D)))

    grid = (b_pad // tile_b,)
    resident = lambda i: (0, 0)     # weights / biases: same block every step
    in_specs = [pl.BlockSpec((tile_b, d_in_pad), lambda i: (i, 0))]
    in_specs += [pl.BlockSpec(w.shape, resident) for w in w_padded]
    in_specs += [pl.BlockSpec(b_packed.shape, resident)]

    out = pl.pallas_call(
        discriminator_kernel,
        out_shape=jax.ShapeDtypeStruct((b_pad, d_out_pad), x.dtype),
        grid=grid,
        in_specs=in_specs,
        out_specs=pl.BlockSpec((tile_b, d_out_pad), lambda i: (i, 0)),
        compiler_params=pltpu.CompilerParams(
            dimension_semantics=("parallel",)),   # 2 TCs on v7x; no-op on v5e/v6e
    )(x_pad, *w_padded, b_packed)

    return out[:B, :dims[-1]]


def init_params(key, output_dim):
    """Deterministic PyTorch-style (uniform +/- 1/sqrt(fan_in)) init.
    Weights stored as [in, out]; biases as [out]."""
    dims = [output_dim, output_dim // 2, output_dim // 4, output_dim // 8,
            output_dim // 4, output_dim // 2, output_dim]
    params = []
    for i in range(6):
        key, kw, kb = jax.random.split(key, 3)
        fan_in, fan_out = dims[i], dims[i + 1]
        bound = 1.0 / (fan_in ** 0.5)
        w = jax.random.uniform(kw, (fan_in, fan_out), jnp.float32, -bound, bound)
        b = jax.random.uniform(kb, (fan_out,), jnp.float32, -bound, bound)
        params.append((w, b))
    return params


def reference_forward(x, params):
    """Pure-JAX fp32 reference (matches PyTorch forward)."""
    h = x
    for w, b in params:
        h = _leaky_relu(h @ w + b[None, :])
    return h


if __name__ == "__main__":
    OUTPUT_DIM = 256   # module uses D/2, D/4, D/8 -> keep divisible by 8
    BATCH = 50         # deliberately not a tile multiple: exercises pad/slice path

    key = jax.random.PRNGKey(0)
    kx, kp = jax.random.split(key)
    x = jax.random.normal(kx, (BATCH, OUTPUT_DIM), dtype=jnp.float32)
    params = init_params(kp, OUTPUT_DIM)

    # Small tile_b so the 1-D batch grid has several steps even at this tiny batch
    # (production default is TILE_B=1024 rows per step).
    out = discriminator_forward(x, params, tile_b=16)
    out = jax.block_until_ready(out)

    ref = reference_forward(x, params)
    assert out.shape == ref.shape == (BATCH, OUTPUT_DIM)
    # bf16 matmul operands with fp32 accumulation -> loose tolerance vs fp32 reference.
    max_err = float(jnp.max(jnp.abs(out - ref)))
    assert jnp.allclose(out, ref, atol=5e-2, rtol=5e-2), f"max_err={max_err}"

    print("KERNEL_OK")
</pallas_src>

<mosaic_0001>
module attributes {stable_mosaic.version = 11 : i64} {
  func.func @discriminator_kernel(%arg0: i32, %arg1: memref<16x256xbf16, #tpu.memory_space<vmem>>, %arg2: memref<256x128xbf16, #tpu.memory_space<vmem>>, %arg3: memref<128x128xbf16, #tpu.memory_space<vmem>>, %arg4: memref<128x128xbf16, #tpu.memory_space<vmem>>, %arg5: memref<128x128xbf16, #tpu.memory_space<vmem>>, %arg6: memref<128x128xbf16, #tpu.memory_space<vmem>>, %arg7: memref<128x256xbf16, #tpu.memory_space<vmem>>, %arg8: memref<8x256xf32, #tpu.memory_space<vmem>>, %arg9: memref<16x256xf32, #tpu.memory_space<vmem>>) attributes {dimension_semantics = [#tpu.dimension_semantics<parallel>], iteration_bounds = array<i64: 4>, scalar_prefetch = 0 : i64, scratch_operands = 0 : i64, tpu.core_type = #tpu.core_type<tc>, window_params = [{transform_indices = @transform_0, window_bounds = array<i64: 16, 256>}, {pipeline_mode = #tpu.pipeline_mode<synchronous>, transform_indices = @transform_1, window_bounds = array<i64: 256, 128>}, {pipeline_mode = #tpu.pipeline_mode<synchronous>, transform_indices = @transform_2, window_bounds = array<i64: 128, 128>}, {pipeline_mode = #tpu.pipeline_mode<synchronous>, transform_indices = @transform_3, window_bounds = array<i64: 128, 128>}, {pipeline_mode = #tpu.pipeline_mode<synchronous>, transform_indices = @transform_4, window_bounds = array<i64: 128, 128>}, {pipeline_mode = #tpu.pipeline_mode<synchronous>, transform_indices = @transform_5, window_bounds = array<i64: 128, 128>}, {pipeline_mode = #tpu.pipeline_mode<synchronous>, transform_indices = @transform_6, window_bounds = array<i64: 128, 256>}, {pipeline_mode = #tpu.pipeline_mode<synchronous>, transform_indices = @transform_7, window_bounds = array<i64: 8, 256>}, {transform_indices = @transform_8, window_bounds = array<i64: 16, 256>}]} {
    %c0 = arith.constant 0 : index
    %c0_0 = arith.constant 0 : index
    %0 = vector.load %arg1[%c0, %c0_0] : memref<16x256xbf16, #tpu.memory_space<vmem>>, vector<16x256xbf16>
    %c0_1 = arith.constant 0 : index
    %c0_2 = arith.constant 0 : index
    %1 = vector.load %arg2[%c0_1, %c0_2] : memref<256x128xbf16, #tpu.memory_space<vmem>>, vector<256x128xbf16>
    %cst = arith.constant dense<0.000000e+00> : vector<16x128xf32>
    %2 = tpu.matmul %0, %1, %cst {dimension_numbers = #tpu.dot_dimension_numbers<[1], [0], [0], [1], [0, 0, 1, 1], [], []>} : vector<16x256xbf16>, vector<256x128xbf16>, vector<16x128xf32> -> vector<16x128xf32>
    %c0_3 = arith.constant 0 : index
    %c0_4 = arith.constant 0 : index
    %3 = vector.load %arg8[%c0_3, %c0_4] : memref<8x256xf32, #tpu.memory_space<vmem>>, vector<1x128xf32>
    %4 = vector.broadcast %3 : vector<1x128xf32> to vector<16x128xf32>
    %5 = arith.addf %2, %4 : vector<16x128xf32>
    %cst_5 = arith.constant 0.000000e+00 : f32
    %6 = vector.broadcast %cst_5 : f32 to vector<16x128xf32>
    %7 = arith.cmpf oge, %5, %6 : vector<16x128xf32>
    %cst_6 = arith.constant 0.00999999977 : f32
    %8 = vector.broadcast %cst_6 : f32 to vector<16x128xf32>
    %9 = arith.mulf %8, %5 : vector<16x128xf32>
    %10 = arith.select %7, %5, %9 : vector<16x128xi1>, vector<16x128xf32>
    %11 = arith.truncf %10 : vector<16x128xf32> to vector<16x128xbf16>
    %c0_7 = arith.constant 0 : index
    %c0_8 = arith.constant 0 : index
    %12 = vector.load %arg3[%c0_7, %c0_8] : memref<128x128xbf16, #tpu.memory_space<vmem>>, vector<128x128xbf16>
    %cst_9 = arith.constant dense<0.000000e+00> : vector<16x128xf32>
    %13 = tpu.matmul %11, %12, %cst_9 {dimension_numbers = #tpu.dot_dimension_numbers<[1], [0], [0], [1], [0, 0, 1, 1], [], []>} : vector<16x128xbf16>, vector<128x128xbf16>, vector<16x128xf32> -> vector<16x128xf32>
    %c1 = arith.constant 1 : index
    %c0_10 = arith.constant 0 : index
    %14 = vector.load %arg8[%c1, %c0_10] : memref<8x256xf32, #tpu.memory_space<vmem>>, vector<1x128xf32>
    %15 = vector.broadcast %14 : vector<1x128xf32> to vector<16x128xf32>
    %16 = arith.addf %13, %15 : vector<16x128xf32>
    %cst_11 = arith.constant 0.000000e+00 : f32
    %17 = vector.broadcast %cst_11 : f32 to vector<16x128xf32>
    %18 = arith.cmpf oge, %16, %17 : vector<16x128xf32>
    %cst_12 = arith.constant 0.00999999977 : f32
    %19 = vector.broadcast %cst_12 : f32 to vector<16x128xf32>
    %20 = arith.mulf %19, %16 : vector<16x128xf32>
    %21 = arith.select %18, %16, %20 : vector<16x128xi1>, vector<16x128xf32>
    %22 = arith.truncf %21 : vector<16x128xf32> to vector<16x128xbf16>
    %c0_13 = arith.constant 0 : index
    %c0_14 = arith.constant 0 : index
    %23 = vector.load %arg4[%c0_13, %c0_14] : memref<128x128xbf16, #tpu.memory_space<vmem>>, vector<128x128xbf16>
    %cst_15 = arith.constant dense<0.000000e+00> : vector<16x128xf32>
    %24 = tpu.matmul %22, %23, %cst_15 {dimension_numbers = #tpu.dot_dimension_numbers<[1], [0], [0], [1], [0, 0, 1, 1], [], []>} : vector<16x128xbf16>, vector<128x128xbf16>, vector<16x128xf32> -> vector<16x128xf32>
    %c2 = arith.constant 2 : index
    %c0_16 = arith.constant 0 : index
    %25 = vector.load %arg8[%c2, %c0_16] : memref<8x256xf32, #tpu.memory_space<vmem>>, vector<1x128xf32>
    %26 = vector.broadcast %25 : vector<1x128xf32> to vector<16x128xf32>
    %27 = arith.addf %24, %26 : vector<16x128xf32>
    %cst_17 = arith.constant 0.000000e+00 : f32
    %28 = vector.broadcast %cst_17 : f32 to vector<16x128xf32>
    %29 = arith.cmpf oge, %27, %28 : vector<16x128xf32>
    %cst_18 = arith.constant 0.00999999977 : f32
    %30 = vector.broadcast %cst_18 : f32 to vector<16x128xf32>
    %31 = arith.mulf %30, %27 : vector<16x128xf32>
    %32 = arith.select %29, %27, %31 : vector<16x128xi1>, vector<16x128xf32>
    %33 = arith.truncf %32 : vector<16x128xf32> to vector<16x128xbf16>
    %c0_19 = arith.constant 0 : index
    %c0_20 = arith.constant 0 : index
    %34 = vector.load %arg5[%c0_19, %c0_20] : memref<128x128xbf16, #tpu.memory_space<vmem>>, vector<128x128xbf16>
    %cst_21 = arith.constant dense<0.000000e+00> : vector<16x128xf32>
    %35 = tpu.matmul %33, %34, %cst_21 {dimension_numbers = #tpu.dot_dimension_numbers<[1], [0], [0], [1], [0, 0, 1, 1], [], []>} : vector<16x128xbf16>, vector<128x128xbf16>, vector<16x128xf32> -> vector<16x128xf32>
    %c3 = arith.constant 3 : index
    %c0_22 = arith.constant 0 : index
    %36 = vector.load %arg8[%c3, %c0_22] : memref<8x256xf32, #tpu.memory_space<vmem>>, vector<1x128xf32>
    %37 = vector.broadcast %36 : vector<1x128xf32> to vector<16x128xf32>
    %38 = arith.addf %35, %37 : vector<16x128xf32>
    %cst_23 = arith.constant 0.000000e+00 : f32
    %39 = vector.broadcast %cst_23 : f32 to vector<16x128xf32>
    %40 = arith.cmpf oge, %38, %39 : vector<16x128xf32>
    %cst_24 = arith.constant 0.00999999977 : f32
    %41 = vector.broadcast %cst_24 : f32 to vector<16x128xf32>
    %42 = arith.mulf %41, %38 : vector<16x128xf32>
    %43 = arith.select %40, %38, %42 : vector<16x128xi1>, vector<16x128xf32>
    %44 = arith.truncf %43 : vector<16x128xf32> to vector<16x128xbf16>
    %c0_25 = arith.constant 0 : index
    %c0_26 = arith.constant 0 : index
    %45 = vector.load %arg6[%c0_25, %c0_26] : memref<128x128xbf16, #tpu.memory_space<vmem>>, vector<128x128xbf16>
    %cst_27 = arith.constant dense<0.000000e+00> : vector<16x128xf32>
    %46 = tpu.matmul %44, %45, %cst_27 {dimension_numbers = #tpu.dot_dimension_numbers<[1], [0], [0], [1], [0, 0, 1, 1], [], []>} : vector<16x128xbf16>, vector<128x128xbf16>, vector<16x128xf32> -> vector<16x128xf32>
    %c4 = arith.constant 4 : index
    %c0_28 = arith.constant 0 : index
    %47 = vector.load %arg8[%c4, %c0_28] : memref<8x256xf32, #tpu.memory_space<vmem>>, vector<1x128xf32>
    %48 = vector.broadcast %47 : vector<1x128xf32> to vector<16x128xf32>
    %49 = arith.addf %46, %48 : vector<16x128xf32>
    %cst_29 = arith.constant 0.000000e+00 : f32
    %50 = vector.broadcast %cst_29 : f32 to vector<16x128xf32>
    %51 = arith.cmpf oge, %49, %50 : vector<16x128xf32>
    %cst_30 = arith.constant 0.00999999977 : f32
    %52 = vector.broadcast %cst_30 : f32 to vector<16x128xf32>
    %53 = arith.mulf %52, %49 : vector<16x128xf32>
    %54 = arith.select %51, %49, %53 : vector<16x128xi1>, vector<16x128xf32>
    %55 = arith.truncf %54 : vector<16x128xf32> to vector<16x128xbf16>
    %c0_31 = arith.constant 0 : index
    %c0_32 = arith.constant 0 : index
    %56 = vector.load %arg7[%c0_31, %c0_32] : memref<128x256xbf16, #tpu.memory_space<vmem>>, vector<128x256xbf16>
    %cst_33 = arith.constant dense<0.000000e+00> : vector<16x256xf32>
    %57 = tpu.matmul %55, %56, %cst_33 {dimension_numbers = #tpu.dot_dimension_numbers<[1], [0], [0], [1], [0, 0, 1, 1], [], []>} : vector<16x128xbf16>, vector<128x256xbf16>, vector<16x256xf32> -> vector<16x256xf32>
    %c5 = arith.constant 5 : index
    %c0_34 = arith.constant 0 : index
    %58 = vector.load %arg8[%c5, %c0_34] : memref<8x256xf32, #tpu.memory_space<vmem>>, vector<1x256xf32>
    %59 = vector.broadcast %58 : vector<1x256xf32> to vector<16x256xf32>
    %60 = arith.addf %57, %59 : vector<16x256xf32>
    %cst_35 = arith.constant 0.000000e+00 : f32
    %61 = vector.broadcast %cst_35 : f32 to vector<16x256xf32>
    %62 = arith.cmpf oge, %60, %61 : vector<16x256xf32>
    %cst_36 = arith.constant 0.00999999977 : f32
    %63 = vector.broadcast %cst_36 : f32 to vector<16x256xf32>
    %64 = arith.mulf %63, %60 : vector<16x256xf32>
    %65 = arith.select %62, %60, %64 : vector<16x256xi1>, vector<16x256xf32>
    %c0_37 = arith.constant 0 : index
    %c0_38 = arith.constant 0 : index
    %66 = vector.load %arg9[%c0_37, %c0_38] : memref<16x256xf32, #tpu.memory_space<vmem>>, vector<16x256xf32>
    tpu.vector_store %arg9[%c0_37, %c0_38], %65 {strides = array<i32>} : memref<16x256xf32, #tpu.memory_space<vmem>>, vector<16x256xf32>,
    return
  }
  func.func @transform_0(%arg0: i32) -> (i32, i32) {
    %c0_i32 = arith.constant 0 : i32
    %c0_i32_0 = arith.constant 0 : i32
    return %arg0, %c0_i32 : i32, i32
  }
  func.func @transform_1(%arg0: i32) -> (i32, i32) {
    %c0_i32 = arith.constant 0 : i32
    %c0_i32_0 = arith.constant 0 : i32
    %c0_i32_1 = arith.constant 0 : i32
    return %c0_i32, %c0_i32_0 : i32, i32
  }
  func.func @transform_2(%arg0: i32) -> (i32, i32) {
    %c0_i32 = arith.constant 0 : i32
    %c0_i32_0 = arith.constant 0 : i32
    %c0_i32_1 = arith.constant 0 : i32
    return %c0_i32, %c0_i32_0 : i32, i32
  }
  func.func @transform_3(%arg0: i32) -> (i32, i32) {
    %c0_i32 = arith.constant 0 : i32
    %c0_i32_0 = arith.constant 0 : i32
    %c0_i32_1 = arith.constant 0 : i32
    return %c0_i32, %c0_i32_0 : i32, i32
  }
  func.func @transform_4(%arg0: i32) -> (i32, i32) {
    %c0_i32 = arith.constant 0 : i32
    %c0_i32_0 = arith.constant 0 : i32
    %c0_i32_1 = arith.constant 0 : i32
    return %c0_i32, %c0_i32_0 : i32, i32
  }
  func.func @transform_5(%arg0: i32) -> (i32, i32) {
    %c0_i32 = arith.constant 0 : i32
    %c0_i32_0 = arith.constant 0 : i32
    %c0_i32_1 = arith.constant 0 : i32
    return %c0_i32, %c0_i32_0 : i32, i32
  }
  func.func @transform_6(%arg0: i32) -> (i32, i32) {
    %c0_i32 = arith.constant 0 : i32
    %c0_i32_0 = arith.constant 0 : i32
    %c0_i32_1 = arith.constant 0 : i32
    return %c0_i32, %c0_i32_0 : i32, i32
  }
  func.func @transform_7(%arg0: i32) -> (i32, i32) {
    %c0_i32 = arith.constant 0 : i32
    %c0_i32_0 = arith.constant 0 : i32
    %c0_i32_1 = arith.constant 0 : i32
    return %c0_i32, %c0_i32_0 : i32, i32
  }
  func.func @transform_8(%arg0: i32) -> (i32, i32) {
    %c0_i32 = arith.constant 0 : i32
    %c0_i32_0 = arith.constant 0 : i32
    return %arg0, %c0_i32 : i32, i32
  }
}

</mosaic_0001>

<llo_original>
// kernel: tpu_custom_call.1
$region0: #{tpu_custom_call.1}
  #allocation0 [shape = 'u32[]', space=smem, size = 0x4, offset = 0x4, fixed_abs, tag = 'smem constant byte address 0x4 - core index']
  #allocation1 [shape = 'u32[144,128]{1,0:T(1,128)}', space=vmem, size = 0x12000, scoped, tag = 'internal scratch']
  %s0 = inlined_call_operand.hbm [shape: bf16[64,256], index: 0, kind: input, shape index: {}]
  %s1 = inlined_call_operand.hbm [shape: bf16[256,128], index: 1, kind: input, shape index: {}]
  %s2 = inlined_call_operand.hbm [shape: bf16[128,128], index: 2, kind: input, shape index: {}]
  %s3 = inlined_call_operand.hbm [shape: bf16[128,128], index: 3, kind: input, shape index: {}]
  %s4 = inlined_call_operand.hbm [shape: bf16[128,128], index: 4, kind: input, shape index: {}]
  %s5 = inlined_call_operand.hbm [shape: bf16[128,128], index: 5, kind: input, shape index: {}]
  %s6 = inlined_call_operand.hbm [shape: bf16[128,256], index: 6, kind: input, shape index: {}]
  %s7 = inlined_call_operand.hbm [shape: f32[8,256], index: 7, kind: input, shape index: {}]
  %s8 = inlined_call_operand.hbm [shape: f32[64,256], index: 8, kind: output, shape index: {}]
  %s9 = sld [smem:[#allocation0]]
  $region97: #{tpu_custom_call.1} parent=0
    _
  %s11 = ssub.s32 1, %s9
  %s12 = scalar_select 0, %s11, %s9
  $region1: #{tpu_custom_call.1} parent=0
    #allocation2 [shape = 'u8[16384]{0}', space=vmem, size = 0x4000, scoped, tag = 'input window, operand 0']
    #allocation3 [shape = 's32[2]{0}', space=sflag, size = 0x8, scoped, tag = 'scoped memory for tpu_custom_call.1']
    #allocation4 [shape = 's32[2]{0}', space=sflag, size = 0x8, scoped, tag = 'scoped memory for tpu_custom_call.1']
    #allocation5 [shape = 'u8[65536]{0}', space=vmem, size = 0x10000, scoped, tag = 'input window, operand 1, single buffered']
    #allocation6 [shape = 's32[1]{0}', space=sflag, size = 0x4, scoped, tag = 'scoped memory for tpu_custom_call.1']
    #allocation7 [shape = 'u8[32768]{0}', space=vmem, size = 0x8000, scoped, tag = 'input window, operand 2, single buffered']
    #allocation8 [shape = 'u8[32768]{0}', space=vmem, size = 0x8000, scoped, tag = 'input window, operand 3, single buffered']
    #allocation9 [shape = 's32[1]{0}', space=sflag, size = 0x4, scoped, tag = 'scoped memory for tpu_custom_call.1']
    #allocation10 [shape = 'u8[32768]{0}', space=vmem, size = 0x8000, scoped, tag = 'input window, operand 4, single buffered']
    #allocation11 [shape = 'u8[32768]{0}', space=vmem, size = 0x8000, scoped, tag = 'input window, operand 5, single buffered']
    #allocation12 [shape = 's32[1]{0}', space=sflag, size = 0x4, scoped, tag = 'scoped memory for tpu_custom_call.1']
    #allocation13 [shape = 'u8[65536]{0}', space=vmem, size = 0x10000, scoped, tag = 'input window, operand 6, single buffered']
    #allocation14 [shape = 'u8[8192]{0}', space=vmem, size = 0x2000, scoped, tag = 'input window, operand 7, single buffered']
    #allocation15 [shape = 's32[1]{0}', space=sflag, size = 0x4, scoped, tag = 'scoped memory for tpu_custom_call.1']
    #allocation16 [shape = 'u8[32768]{0}', space=vmem, size = 0x8000, scoped, tag = 'output window, operand 0']
    %13 = vsyncpa [#allocation3], 0
    %s14 = scalar_lea.sflag [#allocation3], 1
    %15 = vsyncpa %s14, 0
    %16 = vsyncpa [#allocation6], 0
    %17 = vsyncpa [#allocation9], 0
    %18 = vsyncpa [#allocation12], 0
    %19 = vsyncpa [#allocation15], 0
    %20 = vsyncpa [#allocation4], 0
    %s21 = scalar_lea.sflag [#allocation4], 1
    %22 = vsyncpa %s21, 0
    loop: start=0, step=1, limit=6
    $region2: #{tpu_custom_call.1} parent=1 // loop_pre_header
      _
    $region3: #{tpu_custom_call.1} parent=1 // loop_header
      %s24 = sphi 0, %s28
      %p25 = scmp.ge.s32.totalorder %s24, 6
      %s34 = sphi 0, %s36
      %s37 = sphi 0, %s34
      %s38 = sphi 0, %s37
      %s54 = sphi 0, %s38
      %s58 = sphi 0, %s58
      %s60 = sphi 0, %s58
      %s61 = sphi 0, %s60
      %s75 = sphi 0, %s61
      %s79 = sphi 0, %s79
      %s81 = sphi 0, %s79
      %s82 = sphi 0, %s81
      %s96 = sphi 0, %s82
      %s100 = sphi 0, %s100
      %s102 = sphi 0, %s100
      %s103 = sphi 0, %s102
      %s117 = sphi 0, %s103
      %s121 = sphi 0, %s121
      %s123 = sphi 0, %s121
      %s124 = sphi 0, %s123
      %s138 = sphi 0, %s124
      %s142 = sphi 0, %s142
      %s144 = sphi 0, %s142
      %s145 = sphi 0, %s144
      %s159 = sphi 0, %s145
      %s163 = sphi 0, %s163
      %s165 = sphi 0, %s163
      %s166 = sphi 0, %s165
      %s180 = sphi 0, %s166
      %s184 = sphi 0, %s184
      %s186 = sphi 0, %s184
      %s187 = sphi 0, %s186
      %s201 = sphi 0, %s187
      %s207 = sphi 0, %s209
      %s210 = sphi 0, %s207
      %s211 = sphi 0, %s210
      %s227 = sphi 0, %s211
    $region4: #{tpu_custom_call.1} parent=1 // loop_header_branch
      %27 = sbr.rel (%p25) target = $region8
    $region5: #{tpu_custom_call.1} parent=1 // loop_body
      %s29 = ssub.s32 %s24, 1
      %s30 = ssub.s32 %s24, 2
      %s31 = sadd.s32 %s24, 1
      %s32 = ssub.s32 %s24, %s31
      %p33 = scmp.eq.s32.totalorder %s32, 0
      %s35 = sadd.s32 %s34, 1
      %s36 = scalar_select %p33, %s34, %s35
      %p39 = pneg %p33
      %p40 = scmp.eq.s32.totalorder %s24, 3
      %p41 = por %p39, %p40
      %p42 = scmp.ne.s32.totalorder %s34, %s37
      %p43 = scmp.eq.s32.totalorder %s24, 0
      %p44 = por %p42, %p43
      %p45 = scmp.ne.s32.totalorder %s34, %s37
      %p46 = scmp.eq.s32.totalorder %s29, 3
      %p47 = por %p45, %p46
      %p48 = scmp.ne.s32.totalorder %s37, %s38
      %p49 = scmp.eq.s32.totalorder %s29, 0
      %p50 = por %p48, %p49
      %p51 = scmp.ne.s32.totalorder %s37, %s38
      %p52 = scmp.eq.s32.totalorder %s30, 3
      %p53 = por %p51, %p52
      %p55 = scmp.ne.s32.totalorder %s38, %s54
      %p56 = scmp.eq.s32.totalorder %s30, 0
      %p57 = por %p55, %p56
      %s59 = sadd.s32 %s58, 1
      %p62 = scmp.eq.s32.totalorder %s24, 3
      %p63 = scmp.ne.s32.totalorder %s58, %s60
      %p64 = scmp.eq.s32.totalorder %s24, 0
      %p65 = por %p63, %p64
      %p66 = scmp.ne.s32.totalorder %s58, %s60
      %p67 = scmp.eq.s32.totalorder %s29, 3
      %p68 = por %p66, %p67
      %p69 = scmp.ne.s32.totalorder %s60, %s61
      %p70 = scmp.eq.s32.totalorder %s29, 0
      %p71 = por %p69, %p70
      %p72 = scmp.ne.s32.totalorder %s60, %s61
      %p73 = scmp.eq.s32.totalorder %s30, 3
      %p74 = por %p72, %p73
      %p76 = scmp.ne.s32.totalorder %s61, %s75
      %p77 = scmp.eq.s32.totalorder %s30, 0
      %p78 = por %p76, %p77
      %s80 = sadd.s32 %s79, 1
      %p83 = scmp.eq.s32.totalorder %s24, 3
      %p84 = scmp.ne.s32.totalorder %s79, %s81
      %p85 = scmp.eq.s32.totalorder %s24, 0
      %p86 = por %p84, %p85
      %p87 = scmp.ne.s32.totalorder %s79, %s81
      %p88 = scmp.eq.s32.totalorder %s29, 3
      %p89 = por %p87, %p88
      %p90 = scmp.ne.s32.totalorder %s81, %s82
      %p91 = scmp.eq.s32.totalorder %s29, 0
      %p92 = por %p90, %p91
      %p93 = scmp.ne.s32.totalorder %s81, %s82
      %p94 = scmp.eq.s32.totalorder %s30, 3
      %p95 = por %p93, %p94
      %p97 = scmp.ne.s32.totalorder %s82, %s96
      %p98 = scmp.eq.s32.totalorder %s30, 0
      %p99 = por %p97, %p98
      %s101 = sadd.s32 %s100, 1
      %p104 = scmp.eq.s32.totalorder %s24, 3
      %p105 = scmp.ne.s32.totalorder %s100, %s102
      %p106 = scmp.eq.s32.totalorder %s24, 0
      %p107 = por %p105, %p106
      %p108 = scmp.ne.s32.totalorder %s100, %s102
      %p109 = scmp.eq.s32.totalorder %s29, 3
      %p110 = por %p108, %p109
      %p111 = scmp.ne.s32.totalorder %s102, %s103
      %p112 = scmp.eq.s32.totalorder %s29, 0
      %p113 = por %p111, %p112
      %p114 = scmp.ne.s32.totalorder %s102, %s103
      %p115 = scmp.eq.s32.totalorder %s30, 3
      %p116 = por %p114, %p115
      %p118 = scmp.ne.s32.totalorder %s103, %s117
      %p119 = scmp.eq.s32.totalorder %s30, 0
      %p120 = por %p118, %p119
      %s122 = sadd.s32 %s121, 1
      %p125 = scmp.eq.s32.totalorder %s24, 3
      %p126 = scmp.ne.s32.totalorder %s121, %s123
      %p127 = scmp.eq.s32.totalorder %s24, 0
      %p128 = por %p126, %p127
      %p129 = scmp.ne.s32.totalorder %s121, %s123
      %p130 = scmp.eq.s32.totalorder %s29, 3
      %p131 = por %p129, %p130
      %p132 = scmp.ne.s32.totalorder %s123, %s124
      %p133 = scmp.eq.s32.totalorder %s29, 0
      %p134 = por %p132, %p133
      %p135 = scmp.ne.s32.totalorder %s123, %s124
      %p136 = scmp.eq.s32.totalorder %s30, 3
      %p137 = por %p135, %p136
      %p139 = scmp.ne.s32.totalorder %s124, %s138
      %p140 = scmp.eq.s32.totalorder %s30, 0
      %p141 = por %p139, %p140
      %s143 = sadd.s32 %s142, 1
      %p146 = scmp.eq.s32.totalorder %s24, 3
      %p147 = scmp.ne.s32.totalorder %s142, %s144
      %p148 = scmp.eq.s32.totalorder %s24, 0
      %p149 = por %p147, %p148
      %p150 = scmp.ne.s32.totalorder %s142, %s144
      %p151 = scmp.eq.s32.totalorder %s29, 3
      %p152 = por %p150, %p151
      %p153 = scmp.ne.s32.totalorder %s144, %s145
      %p154 = scmp.eq.s32.totalorder %s29, 0
      %p155 = por %p153, %p154
      %p156 = scmp.ne.s32.totalorder %s144, %s145
      %p157 = scmp.eq.s32.totalorder %s30, 3
      %p158 = por %p156, %p157
      %p160 = scmp.ne.s32.totalorder %s145, %s159
      %p161 = scmp.eq.s32.totalorder %s30, 0
      %p162 = por %p160, %p161
      %s164 = sadd.s32 %s163, 1
      %p167 = scmp.eq.s32.totalorder %s24, 3
      %p168 = scmp.ne.s32.totalorder %s163, %s165
      %p169 = scmp.eq.s32.totalorder %s24, 0
      %p170 = por %p168, %p169
      %p171 = scmp.ne.s32.totalorder %s163, %s165
      %p172 = scmp.eq.s32.totalorder %s29, 3
      %p173 = por %p171, %p172
      %p174 = scmp.ne.s32.totalorder %s165, %s166
      %p175 = scmp.eq.s32.totalorder %s29, 0
      %p176 = por %p174, %p175
      %p177 = scmp.ne.s32.totalorder %s165, %s166
      %p178 = scmp.eq.s32.totalorder %s30, 3
      %p179 = por %p177, %p178
      %p181 = scmp.ne.s32.totalorder %s166, %s180
      %p182 = scmp.eq.s32.totalorder %s30, 0
      %p183 = por %p181, %p182
      %s185 = sadd.s32 %s184, 1
      %p188 = scmp.eq.s32.totalorder %s24, 3
      %p189 = scmp.ne.s32.totalorder %s184, %s186
      %p190 = scmp.eq.s32.totalorder %s24, 0
      %p191 = por %p189, %p190
      %p192 = scmp.ne.s32.totalorder %s184, %s186
      %p193 = scmp.eq.s32.totalorder %s29, 3
      %p194 = por %p192, %p193
      %p195 = scmp.ne.s32.totalorder %s186, %s187
      %p196 = scmp.eq.s32.totalorder %s29, 0
      %p197 = por %p195, %p196
      %p198 = scmp.ne.s32.totalorder %s186, %s187
      %p199 = scmp.eq.s32.totalorder %s30, 3
      %p200 = por %p198, %p199
      %p202 = scmp.ne.s32.totalorder %s187, %s201
      %p203 = scmp.eq.s32.totalorder %s30, 0
      %p204 = por %p202, %p203
      %s205 = ssub.s32 %s24, %s31
      %p206 = scmp.eq.s32.totalorder %s205, 0
      %s208 = sadd.s32 %s207, 1
      %s209 = scalar_select %p206, %s207, %s208
      %p212 = pneg %p206
      %p213 = scmp.eq.s32.totalorder %s24, 3
      %p214 = por %p212, %p213
      %p215 = scmp.ne.s32.totalorder %s207, %s210
      %p216 = scmp.eq.s32.totalorder %s24, 0
      %p217 = por %p215, %p216
      %p218 = scmp.ne.s32.totalorder %s207, %s210
      %p219 = scmp.eq.s32.totalorder %s29, 3
      %p220 = por %p218, %p219
      %p221 = scmp.ne.s32.totalorder %s210, %s211
      %p222 = scmp.eq.s32.totalorder %s29, 0
      %p223 = por %p221, %p222
      %p224 = scmp.ne.s32.totalorder %s210, %s211
      %p225 = scmp.eq.s32.totalorder %s30, 3
      %p226 = por %p224, %p225
      %p228 = scmp.ne.s32.totalorder %s211, %s227
      %p229 = scmp.eq.s32.totalorder %s30, 0
      %p230 = por %p228, %p229
      %p231 = scmp.le.s32.totalorder 1, %s24
      %p232 = scmp.lt.s32.totalorder %s24, 5
      %p233 = pnand %p231, %p232
      %p234 = pneg %p233
      // Predicated region
      $region9: #{tpu_custom_call.1} parent=5 // pred_check
        _
      $region10: #{tpu_custom_call.1} parent=5 // pred_check_branch
        %236 = sbr.rel (%p233) target = $region12
      $region11: #{tpu_custom_call.1} parent=5 // pred_region
        %s237 = ssub.s32 %s24, 1
        // Predicated region
        $region13: #{tpu_custom_call.1} parent=11 // pred_check
          %p238 = pneg %p71
        $region14: #{tpu_custom_call.1} parent=11 // pred_check_branch
          %240 = sbr.rel (%p238) target = $region16
        $region15: #{tpu_custom_call.1} parent=11 // pred_region
          %s242 = ssub.s32 2048, 2048
          %243 = vsyncadd [#allocation6], %s242
          %s244 = sshll.u32 [#allocation5], 4
          %s245 = int_to_ptr.vmem [resolvable:$true] %s244
          %250 = dma.hbm_to_vmem [thread:$0]  %s1, 2048, %s245, [#allocation6], 64, 64, 4
        $region16: #{tpu_custom_call.1} parent=11 // pred_fallthru
          _
        // Predicated region
        $region17: #{tpu_custom_call.1} parent=11 // pred_check
          %p251 = pneg %p92
        $region18: #{tpu_custom_call.1} parent=11 // pred_check_branch
          %253 = sbr.rel (%p251) target = $region20
        $region19: #{tpu_custom_call.1} parent=11 // pred_region
          %s255 = ssub.s32 1024, 1024
          %256 = vsyncadd [#allocation6], %s255
          %s257 = sshll.u32 [#allocation7], 4
          %s258 = int_to_ptr.vmem [resolvable:$true] %s257
          %263 = dma.hbm_to_vmem [thread:$0]  %s2, 1024, %s258, [#allocation6], 64, 64, 4
        $region20: #{tpu_custom_call.1} parent=11 // pred_fallthru
          _
        // Predicated region
        $region21: #{tpu_custom_call.1} parent=11 // pred_check
          %p264 = pneg %p113
        $region22: #{tpu_custom_call.1} parent=11 // pred_check_branch
          %266 = sbr.rel (%p264) target = $region24
        $region23: #{tpu_custom_call.1} parent=11 // pred_region
          %s268 = ssub.s32 1024, 1024
          %269 = vsyncadd [#allocation9], %s268
          %s270 = sshll.u32 [#allocation8], 4
          %s271 = int_to_ptr.vmem [resolvable:$true] %s270
          %276 = dma.hbm_to_vmem [thread:$0]  %s3, 1024, %s271, [#allocation9], 64, 64, 4
        $region24: #{tpu_custom_call.1} parent=11 // pred_fallthru
          _
        // Predicated region
        $region25: #{tpu_custom_call.1} parent=11 // pred_check
          %p277 = pneg %p134
        $region26: #{tpu_custom_call.1} parent=11 // pred_check_branch
          %279 = sbr.rel (%p277) target = $region28
        $region27: #{tpu_custom_call.1} parent=11 // pred_region
          %s281 = ssub.s32 1024, 1024
          %282 = vsyncadd [#allocation9], %s281
          %s283 = sshll.u32 [#allocation10], 4
          %s284 = int_to_ptr.vmem [resolvable:$true] %s283
          %289 = dma.hbm_to_vmem [thread:$0]  %s4, 1024, %s284, [#allocation9], 64, 64, 4
        $region28: #{tpu_custom_call.1} parent=11 // pred_fallthru
          _
        // Predicated region
        $region29: #{tpu_custom_call.1} parent=11 // pred_check
          %p290 = pneg %p155
        $region30: #{tpu_custom_call.1} parent=11 // pred_check_branch
          %292 = sbr.rel (%p290) target = $region32
        $region31: #{tpu_custom_call.1} parent=11 // pred_region
          %s294 = ssub.s32 1024, 1024
          %295 = vsyncadd [#allocation12], %s294
          %s296 = sshll.u32 [#allocation11], 4
          %s297 = int_to_ptr.vmem [resolvable:$true] %s296
          %302 = dma.hbm_to_vmem [thread:$0]  %s5, 1024, %s297, [#allocation12], 64, 64, 4
        $region32: #{tpu_custom_call.1} parent=11 // pred_fallthru
          _
        // Predicated region
        $region33: #{tpu_custom_call.1} parent=11 // pred_check
          %p303 = pneg %p176
        $region34: #{tpu_custom_call.1} parent=11 // pred_check_branch
          %305 = sbr.rel (%p303) target = $region36
        $region35: #{tpu_custom_call.1} parent=11 // pred_region
          %s307 = ssub.s32 2048, 2048
          %308 = vsyncadd [#allocation12], %s307
          %s309 = sshll.u32 [#allocation13], 4
          %s310 = int_to_ptr.vmem [resolvable:$true] %s309
          %315 = dma.hbm_to_vmem [thread:$0]  %s6, 2048, %s310, [#allocation12], 128, 128, 8
        $region36: #{tpu_custom_call.1} parent=11 // pred_fallthru
          _
        // Predicated region
        $region37: #{tpu_custom_call.1} parent=11 // pred_check
          %p316 = pneg %p197
        $region38: #{tpu_custom_call.1} parent=11 // pred_check_branch
          %318 = sbr.rel (%p316) target = $region40
        $region39: #{tpu_custom_call.1} parent=11 // pred_region
          %s320 = ssub.s32 256, 256
          %321 = vsyncadd [#allocation15], %s320
          %s323 = sshll.u32 [#allocation14], 4
          %s324 = int_to_ptr.vmem [resolvable:$true] %s323
          %326 = dma.hbm_to_vmem [thread:$0]  %s7, 256, %s324, [#allocation15]
        $region40: #{tpu_custom_call.1} parent=11 // pred_fallthru
          _
      $region12: #{tpu_custom_call.1} parent=5 // pred_fallthru
        _
      %p327 = scmp.lt.s32.totalorder %s24, 4
      // Predicated region
      $region41: #{tpu_custom_call.1} parent=5 // pred_check
        %p328 = pneg %p327
      $region42: #{tpu_custom_call.1} parent=5 // pred_check_branch
        %330 = sbr.rel (%p328) target = $region44
      $region43: #{tpu_custom_call.1} parent=5 // pred_region
        // Predicated region
        $region45: #{tpu_custom_call.1} parent=43 // pred_check
          %p331 = pneg %p44
        $region46: #{tpu_custom_call.1} parent=43 // pred_check_branch
          %333 = sbr.rel (%p331) target = $region48
        $region47: #{tpu_custom_call.1} parent=43 // pred_region
          %s334 = sand.u32 %s34, 1
          %s335 = scalar_lea.sflag [#allocation3], %s334
          %s336 = sand.u32 %s34, 1
          %s337 = smul.addr %s336, 16
          %s338 = scalar_lea.vmem [#allocation2], %s337
          %s339 = smul.u32 2, %s24
          %s341 = ssub.s32 256, 256
          %342 = vsyncadd %s335, %s341
          %s343 = smul.addr %s339, 2
          %s344 = smul.addr %s343, 64
          %s345 = scalar_lea.hbm %s0, %s344
          %s346 = sshll.u32 %s338, 4
          %s347 = int_to_ptr.vmem [resolvable:$true] %s346
          %352 = dma.hbm_to_vmem [thread:$0]  %s345, 256, %s347, %s335, 128, 128, 8
        $region48: #{tpu_custom_call.1} parent=43 // pred_fallthru
          _
      $region44: #{tpu_custom_call.1} parent=5 // pred_fallthru
        _
      %p353 = scmp.le.s32.totalorder 1, %s24
      %p354 = scmp.lt.s32.totalorder %s24, 5
      %p355 = pnand %p353, %p354
      %p356 = pneg %p355
      // Predicated region
      $region49: #{tpu_custom_call.1} parent=5 // pred_check
        _
      $region50: #{tpu_custom_call.1} parent=5 // pred_check_branch
        %358 = sbr.rel (%p355) target = $region52
      $region51: #{tpu_custom_call.1} parent=5 // pred_region
        %s359 = ssub.s32 %s24, 1
        %s360 = sand.u32 %s37, 1
        %s361 = scalar_lea.sflag [#allocation3], %s360
        %s362 = sand.u32 %s37, 1
        %s363 = smul.addr %s362, 16
        %s364 = scalar_lea.vmem [#allocation2], %s363
        // Predicated region
        $region53: #{tpu_custom_call.1} parent=51 // pred_check
          %p365 = pneg %p50
        $region54: #{tpu_custom_call.1} parent=51 // pred_check_branch
          %367 = sbr.rel (%p365) target = $region56
        $region55: #{tpu_custom_call.1} parent=51 // pred_region
          %368 = dma.done %s361, 256
        $region56: #{tpu_custom_call.1} parent=51 // pred_fallthru
          _
        // Predicated region
        $region57: #{tpu_custom_call.1} parent=51 // pred_check
          %p369 = pneg %p71
        $region58: #{tpu_custom_call.1} parent=51 // pred_check_branch
          %371 = sbr.rel (%p369) target = $region60
        $region59: #{tpu_custom_call.1} parent=51 // pred_region
          %372 = dma.done [#allocation6], 2048
        $region60: #{tpu_custom_call.1} parent=51 // pred_fallthru
          _
        // Predicated region
        $region61: #{tpu_custom_call.1} parent=51 // pred_check
          %p373 = pneg %p92
        $region62: #{tpu_custom_call.1} parent=51 // pred_check_branch
          %375 = sbr.rel (%p373) target = $region64
        $region63: #{tpu_custom_call.1} parent=51 // pred_region
          %376 = dma.done [#allocation6], 1024
        $region64: #{tpu_custom_call.1} parent=51 // pred_fallthru
          _
        // Predicated region
        $region65: #{tpu_custom_call.1} parent=51 // pred_check
          %p377 = pneg %p113
        $region66: #{tpu_custom_call.1} parent=51 // pred_check_branch
          %379 = sbr.rel (%p377) target = $region68
        $region67: #{tpu_custom_call.1} parent=51 // pred_region
          %380 = dma.done [#allocation9], 1024
        $region68: #{tpu_custom_call.1} parent=51 // pred_fallthru
          _
        // Predicated region
        $region69: #{tpu_custom_call.1} parent=51 // pred_check
          %p381 = pneg %p134
        $region70: #{tpu_custom_call.1} parent=51 // pred_check_branch
          %383 = sbr.rel (%p381) target = $region72
        $region71: #{tpu_custom_call.1} parent=51 // pred_region
          %384 = dma.done [#allocation9], 1024
        $region72: #{tpu_custom_call.1} parent=51 // pred_fallthru
          _
        // Predicated region
        $region73: #{tpu_custom_call.1} parent=51 // pred_check
          %p385 = pneg %p155
        $region74: #{tpu_custom_call.1} parent=51 // pred_check_branch
          %387 = sbr.rel (%p385) target = $region76
        $region75: #{tpu_custom_call.1} parent=51 // pred_region
          %388 = dma.done [#allocation12], 1024
        $region76: #{tpu_custom_call.1} parent=51 // pred_fallthru
          _
        // Predicated region
        $region77: #{tpu_custom_call.1} parent=51 // pred_check
          %p389 = pneg %p176
        $region78: #{tpu_custom_call.1} parent=51 // pred_check_branch
          %391 = sbr.rel (%p389) target = $region80
        $region79: #{tpu_custom_call.1} parent=51 // pred_region
          %392 = dma.done [#allocation12], 2048
        $region80: #{tpu_custom_call.1} parent=51 // pred_fallthru
          _
        // Predicated region
        $region81: #{tpu_custom_call.1} parent=51 // pred_check
          %p393 = pneg %p197
        $region82: #{tpu_custom_call.1} parent=51 // pred_check_branch
          %395 = sbr.rel (%p393) target = $region84
        $region83: #{tpu_custom_call.1} parent=51 // pred_region
          %396 = dma.done [#allocation15], 256
        $region84: #{tpu_custom_call.1} parent=51 // pred_fallthru
          _
        %s397 = sand.u32 %s37, 1
        %s398 = scalar_lea.sflag [#allocation3], %s397
        %s399 = sand.u32 %s37, 1
        %s400 = smul.addr %s399, 16
        %s401 = scalar_lea.vmem [#allocation2], %s400
        %p402 = pneg %p50
        %p403 = pneg %p47
        %p404 = pneg %p71
        %p405 = pneg %p68
        %p406 = pneg %p92
        %p407 = pneg %p89
        %p408 = pneg %p113
        %p409 = pneg %p110
        %p410 = pneg %p134
        %p411 = pneg %p131
        %p412 = pneg %p155
        %p413 = pneg %p152
        %p414 = pneg %p176
        %p415 = pneg %p173
        %p416 = pneg %p197
        %p417 = pneg %p194
        %p418 = pneg %p223
        %p419 = pneg %p220
        %s420 = sand.u32 %s210, 1
        %s421 = scalar_lea.sflag [#allocation4], %s420
        %s422 = sand.u32 %s210, 1
        %s423 = smul.addr %s422, 32
        %s424 = scalar_lea.vmem [#allocation16], %s423
        %s425 = smul.u32 2, %s29
        %s426 = smul.u32 2, %s29
        %v428 = vld [vmem:[%s364] sm:$0xff]
        %v429 = vld [vmem:[%s364 + $0x8] sm:$0xff]
        %v430 = vld [vmem:[#allocation5] sm:$0xf]
        %v431 = vld [vmem:[#allocation5 + $0x4] sm:$0xf]
        %v432 = vld [vmem:[#allocation5 + $0x8] sm:$0xf]
        %v433 = vld [vmem:[#allocation5 + $0xc] sm:$0xf]
        %v434 = vld [vmem:[#allocation5 + $0x10] sm:$0xf]
        %v435 = vld [vmem:[#allocation5 + $0x14] sm:$0xf]
        %v436 = vld [vmem:[#allocation5 + $0x18] sm:$0xf]
        %v437 = vld [vmem:[#allocation5 + $0x1c] sm:$0xf]
        %v438 = vld [vmem:[#allocation5 + $0x20] sm:$0xf]
        %v439 = vld [vmem:[#allocation5 + $0x24] sm:$0xf]
        %v440 = vld [vmem:[#allocation5 + $0x28] sm:$0xf]
        %v441 = vld [vmem:[#allocation5 + $0x2c] sm:$0xf]
        %v442 = vld [vmem:[#allocation5 + $0x30] sm:$0xf]
        %v443 = vld [vmem:[#allocation5 + $0x34] sm:$0xf]
        %v444 = vld [vmem:[#allocation5 + $0x38] sm:$0xf]
        %v445 = vld [vmem:[#allocation5 + $0x3c] sm:$0xf]
        %v446 = vld [vmem:[#allocation5 + $0x40] sm:$0xf]
        %v447 = vld [vmem:[#allocation5 + $0x44] sm:$0xf]
        %v448 = vld [vmem:[#allocation5 + $0x48] sm:$0xf]
        %v449 = vld [vmem:[#allocation5 + $0x4c] sm:$0xf]
        %v450 = vld [vmem:[#allocation5 + $0x50] sm:$0xf]
        %v451 = vld [vmem:[#allocation5 + $0x54] sm:$0xf]
        %v452 = vld [vmem:[#allocation5 + $0x58] sm:$0xf]
        %v453 = vld [vmem:[#allocation5 + $0x5c] sm:$0xf]
        %v454 = vld [vmem:[#allocation5 + $0x60] sm:$0xf]
        %v455 = vld [vmem:[#allocation5 + $0x64] sm:$0xf]
        %v456 = vld [vmem:[#allocation5 + $0x68] sm:$0xf]
        %v457 = vld [vmem:[#allocation5 + $0x6c] sm:$0xf]
        %v458 = vld [vmem:[#allocation5 + $0x70] sm:$0xf]
        %v459 = vld [vmem:[#allocation5 + $0x74] sm:$0xf]
        %v460 = vld [vmem:[#allocation5 + $0x78] sm:$0xf]
        %v461 = vld [vmem:[#allocation5 + $0x7c] sm:$0xf]
        %v462 = vld [vmem:[#allocation14] ss:$0 sm:$0xff]
        %v465 = vunpack.c.l.b16 %v428
        %v466 = vunpack.c.h.b16 %v428
        %v467 = vunpack.c.l.b16 %v429
        %v468 = vunpack.c.h.b16 %v429
        %v469 = vpack.c.b16 %v467, %v465
        %v470 = vpack.c.b16 %v468, %v466
        %v505 = vunpack.c.l.b16 %v430
        %v506 = vunpack.c.l.b16 %v431
        %v507 = vunpack.c.l.b16 %v432
        %v508 = vunpack.c.l.b16 %v433
        %v509 = vunpack.c.l.b16 %v434
        %v510 = vunpack.c.l.b16 %v435
        %v511 = vunpack.c.l.b16 %v436
        %v512 = vunpack.c.l.b16 %v437
        %v513 = vunpack.c.l.b16 %v438
        %v514 = vunpack.c.l.b16 %v439
        %v515 = vunpack.c.l.b16 %v440
        %v516 = vunpack.c.l.b16 %v441
        %v517 = vunpack.c.l.b16 %v442
        %v518 = vunpack.c.l.b16 %v443
        %v519 = vunpack.c.l.b16 %v444
        %v520 = vunpack.c.l.b16 %v445
        %v521 = vunpack.c.l.b16 %v446
        %v522 = vunpack.c.l.b16 %v447
        %v523 = vunpack.c.l.b16 %v448
        %v524 = vunpack.c.l.b16 %v449
        %v525 = vunpack.c.l.b16 %v450
        %v526 = vunpack.c.l.b16 %v451
        %v527 = vunpack.c.l.b16 %v452
        %v528 = vunpack.c.l.b16 %v453
        %v529 = vunpack.c.l.b16 %v454
        %v530 = vunpack.c.l.b16 %v455
        %v531 = vunpack.c.l.b16 %v456
        %v532 = vunpack.c.l.b16 %v457
        %v533 = vunpack.c.l.b16 %v458
        %v534 = vunpack.c.l.b16 %v459
        %v535 = vunpack.c.l.b16 %v460
        %v536 = vunpack.c.l.b16 %v461
        %v537 = vpack.c.b16 %v506, %v505
        %v538 = vpack.c.b16 %v508, %v507
        %v539 = vpack.c.b16 %v510, %v509
        %v540 = vpack.c.b16 %v512, %v511
        %v541 = vpack.c.b16 %v514, %v513
        %v542 = vpack.c.b16 %v516, %v515
        %v543 = vpack.c.b16 %v518, %v517
        %v544 = vpack.c.b16 %v520, %v519
        %v545 = vpack.c.b16 %v522, %v521
        %v546 = vpack.c.b16 %v524, %v523
        %v547 = vpack.c.b16 %v526, %v525
        %v548 = vpack.c.b16 %v528, %v527
        %v549 = vpack.c.b16 %v530, %v529
        %v550 = vpack.c.b16 %v532, %v531
        %v551 = vpack.c.b16 %v534, %v533
        %v552 = vpack.c.b16 %v536, %v535
        %569 = vmatprep.subr.bf16.mxu0 0
        %570 = vmatpush1.bf16.msra.mxu0 %v544
        %571 = vmatprep.subr.bf16.mxu0 0
        %572 = vmatpush1.bf16.msra.mxu0 %v543
        %573 = vmatprep.subr.bf16.mxu0 0
        %574 = vmatpush1.bf16.msra.mxu0 %v542
        %575 = vmatprep.subr.bf16.mxu0 0
        %576 = vmatpush1.bf16.msra.mxu0 %v541
        %577 = vmatprep.subr.bf16.mxu0 0
        %578 = vmatpush1.bf16.msra.mxu0 %v540
        %579 = vmatprep.subr.bf16.mxu0 0
        %580 = vmatpush1.bf16.msra.mxu0 %v539
        %581 = vmatprep.subr.bf16.mxu0 0
        %582 = vmatpush1.bf16.msra.mxu0 %v538
        %583 = vmatprep.subr.bf16.mxu0 0
        %584 = vmatpush1.bf16.msra.mxu0 %v537
        %585 = vmatprep.subr.bf16.mxu0 0
        %586 = vmatpush2.bf16.msra.mxu0 %v552
        %587 = vmatprep.subr.bf16.mxu0 0
        %588 = vmatpush2.bf16.msra.mxu0 %v551
        %589 = vmatprep.subr.bf16.mxu0 0
        %590 = vmatpush2.bf16.msra.mxu0 %v550
        %591 = vmatprep.subr.bf16.mxu0 0
        %592 = vmatpush2.bf16.msra.mxu0 %v549
        %593 = vmatprep.subr.bf16.mxu0 0
        %594 = vmatpush2.bf16.msra.mxu0 %v548
        %595 = vmatprep.subr.bf16.mxu0 0
        %596 = vmatpush2.bf16.msra.mxu0 %v547
        %597 = vmatprep.subr.bf16.mxu0 0
        %598 = vmatpush2.bf16.msra.mxu0 %v546
        %599 = vmatprep.subr.bf16.mxu0 0
        %600 = vmatpush2.bf16.msra.mxu0 %v545
        %601 = vmatprep.mubr.bf16.mxu0 %v470
        %602 = vmatmul.mubr.bf16.gmra.mxu0 %v469
        %v603 = vpop.f32.mrf.mxu0
        %v604 = vadd.f32 %v462, %v603
        %v605 = vpop.f32.mrf.mxu0
        %v606 = vpop.f32.mrf.mxu0
        %v607 = vadd.f32 %v462, %v606
        %v608 = vpop.f32.mrf.mxu0
        %609 = vdwg.mxu0
        %vm610 = vcmp.ge.f32.partialorder %v604, 0.0
        %vm611 = vcmp.ge.f32.partialorder %v607, 0.0
        %v612 = vmul.f32 %v604, 0.01
        %v613 = vmul.f32 %v607, 0.01
        %v614 = vsel %vm610, %v604, %v612
        %v615 = vsel %vm611, %v607, %v613
        %v616 = vpack.c.bf16 %v615, %v614
        %v617 = vld [vmem:[#allocation7] sm:$0xf]
        %v618 = vld [vmem:[#allocation7 + $0x4] sm:$0xf]
        %v619 = vld [vmem:[#allocation7 + $0x8] sm:$0xf]
        %v620 = vld [vmem:[#allocation7 + $0xc] sm:$0xf]
        %v621 = vld [vmem:[#allocation7 + $0x10] sm:$0xf]
        %v622 = vld [vmem:[#allocation7 + $0x14] sm:$0xf]
        %v623 = vld [vmem:[#allocation7 + $0x18] sm:$0xf]
        %v624 = vld [vmem:[#allocation7 + $0x1c] sm:$0xf]
        %v625 = vld [vmem:[#allocation7 + $0x20] sm:$0xf]
        %v626 = vld [vmem:[#allocation7 + $0x24] sm:$0xf]
        %v627 = vld [vmem:[#allocation7 + $0x28] sm:$0xf]
        %v628 = vld [vmem:[#allocation7 + $0x2c] sm:$0xf]
        %v629 = vld [vmem:[#allocation7 + $0x30] sm:$0xf]
        %v630 = vld [vmem:[#allocation7 + $0x34] sm:$0xf]
        %v631 = vld [vmem:[#allocation7 + $0x38] sm:$0xf]
        %v632 = vld [vmem:[#allocation7 + $0x3c] sm:$0xf]
        %v633 = vld [vmem:[#allocation14 + $0x1] ss:$0 sm:$0xff]
        %v650 = vunpack.c.l.b16 %v617
        %v651 = vunpack.c.l.b16 %v618
        %v652 = vunpack.c.l.b16 %v619
        %v653 = vunpack.c.l.b16 %v620
        %v654 = vunpack.c.l.b16 %v621
        %v655 = vunpack.c.l.b16 %v622
        %v656 = vunpack.c.l.b16 %v623
        %v657 = vunpack.c.l.b16 %v624
        %v658 = vunpack.c.l.b16 %v625
        %v659 = vunpack.c.l.b16 %v626
        %v660 = vunpack.c.l.b16 %v627
        %v661 = vunpack.c.l.b16 %v628
        %v662 = vunpack.c.l.b16 %v629
        %v663 = vunpack.c.l.b16 %v630
        %v664 = vunpack.c.l.b16 %v631
        %v665 = vunpack.c.l.b16 %v632
        %v666 = vpack.c.b16 %v651, %v650
        %v667 = vpack.c.b16 %v653, %v652
        %v668 = vpack.c.b16 %v655, %v654
        %v669 = vpack.c.b16 %v657, %v656
        %v670 = vpack.c.b16 %v659, %v658
        %v671 = vpack.c.b16 %v661, %v660
        %v672 = vpack.c.b16 %v663, %v662
        %v673 = vpack.c.b16 %v665, %v664
        %682 = vmatprep.subr.bf16.mxu0 0
        %683 = vmatpush1.bf16.msra.mxu0 %v673
        %684 = vmatprep.subr.bf16.mxu0 0
        %685 = vmatpush1.bf16.msra.mxu0 %v672
        %686 = vmatprep.subr.bf16.mxu0 0
        %687 = vmatpush1.bf16.msra.mxu0 %v671
        %688 = vmatprep.subr.bf16.mxu0 0
        %689 = vmatpush1.bf16.msra.mxu0 %v670
        %690 = vmatprep.subr.bf16.mxu0 0
        %691 = vmatpush1.bf16.msra.mxu0 %v669
        %692 = vmatprep.subr.bf16.mxu0 0
        %693 = vmatpush1.bf16.msra.mxu0 %v668
        %694 = vmatprep.subr.bf16.mxu0 0
        %695 = vmatpush1.bf16.msra.mxu0 %v667
        %696 = vmatprep.subr.bf16.mxu0 0
        %697 = vmatpush1.bf16.msra.mxu0 %v666
        %698 = vmatprep.subr.bf16.mxu0 0
        %699 = vmatpush2.bf16.msra.mxu0 0
        %700 = vmatprep.subr.bf16.mxu0 0
        %701 = vmatpush2.bf16.msra.mxu0 0
        %702 = vmatprep.subr.bf16.mxu0 0
        %703 = vmatpush2.bf16.msra.mxu0 0
        %704 = vmatprep.subr.bf16.mxu0 0
        %705 = vmatpush2.bf16.msra.mxu0 0
        %706 = vmatprep.subr.bf16.mxu0 0
        %707 = vmatpush2.bf16.msra.mxu0 0
        %708 = vmatprep.subr.bf16.mxu0 0
        %709 = vmatpush2.bf16.msra.mxu0 0
        %710 = vmatprep.subr.bf16.mxu0 0
        %711 = vmatpush2.bf16.msra.mxu0 0
        %712 = vmatprep.subr.bf16.mxu0 0
        %713 = vmatpush2.bf16.msra.mxu0 0
        %714 = vmatprep.mubr.bf16.mxu0 0
        %715 = vmatmul.mubr.bf16.gmra.mxu0 %v616
        %v716 = vpop.f32.mrf.mxu0
        %v717 = vadd.f32 %v633, %v716
        %v718 = vpop.f32.mrf.mxu0
        %v719 = vpop.f32.mrf.mxu0
        %v720 = vadd.f32 %v633, %v719
        %v721 = vpop.f32.mrf.mxu0
        %722 = vdwg.mxu0
        %vm723 = vcmp.ge.f32.partialorder %v717, 0.0
        %vm724 = vcmp.ge.f32.partialorder %v720, 0.0
        %v725 = vmul.f32 %v717, 0.01
        %v726 = vmul.f32 %v720, 0.01
        %v727 = vsel %vm723, %v717, %v725
        %v728 = vsel %vm724, %v720, %v726
        %v729 = vpack.c.bf16 %v728, %v727
        %v730 = vld [vmem:[#allocation8] sm:$0xf]
        %v731 = vld [vmem:[#allocation8 + $0x4] sm:$0xf]
        %v732 = vld [vmem:[#allocation8 + $0x8] sm:$0xf]
        %v733 = vld [vmem:[#allocation8 + $0xc] sm:$0xf]
        %v734 = vld [vmem:[#allocation8 + $0x10] sm:$0xf]
        %v735 = vld [vmem:[#allocation8 + $0x14] sm:$0xf]
        %v736 = vld [vmem:[#allocation8 + $0x18] sm:$0xf]
        %v737 = vld [vmem:[#allocation8 + $0x1c] sm:$0xf]
        %v738 = vld [vmem:[#allocation8 + $0x20] sm:$0xf]
        %v739 = vld [vmem:[#allocation8 + $0x24] sm:$0xf]
        %v740 = vld [vmem:[#allocation8 + $0x28] sm:$0xf]
        %v741 = vld [vmem:[#allocation8 + $0x2c] sm:$0xf]
        %v742 = vld [vmem:[#allocation8 + $0x30] sm:$0xf]
        %v743 = vld [vmem:[#allocation8 + $0x34] sm:$0xf]
        %v744 = vld [vmem:[#allocation8 + $0x38] sm:$0xf]
        %v745 = vld [vmem:[#allocation8 + $0x3c] sm:$0xf]
        %v746 = vld [vmem:[#allocation14 + $0x2] ss:$0 sm:$0xff]
        %v763 = vunpack.c.l.b16 %v730
        %v764 = vunpack.c.l.b16 %v731
        %v765 = vunpack.c.l.b16 %v732
        %v766 = vunpack.c.l.b16 %v733
        %v767 = vunpack.c.l.b16 %v734
        %v768 = vunpack.c.l.b16 %v735
        %v769 = vunpack.c.l.b16 %v736
        %v770 = vunpack.c.l.b16 %v737
        %v771 = vunpack.c.l.b16 %v738
        %v772 = vunpack.c.l.b16 %v739
        %v773 = vunpack.c.l.b16 %v740
        %v774 = vunpack.c.l.b16 %v741
        %v775 = vunpack.c.l.b16 %v742
        %v776 = vunpack.c.l.b16 %v743
        %v777 = vunpack.c.l.b16 %v744
        %v778 = vunpack.c.l.b16 %v745
        %v779 = vpack.c.b16 %v764, %v763
        %v780 = vpack.c.b16 %v766, %v765
        %v781 = vpack.c.b16 %v768, %v767
        %v782 = vpack.c.b16 %v770, %v769
        %v783 = vpack.c.b16 %v772, %v771
        %v784 = vpack.c.b16 %v774, %v773
        %v785 = vpack.c.b16 %v776, %v775
        %v786 = vpack.c.b16 %v778, %v777
        %795 = vmatprep.subr.bf16.mxu0 0
        %796 = vmatpush1.bf16.msra.mxu0 %v786
        %797 = vmatprep.subr.bf16.mxu0 0
        %798 = vmatpush1.bf16.msra.mxu0 %v785
        %799 = vmatprep.subr.bf16.mxu0 0
        %800 = vmatpush1.bf16.msra.mxu0 %v784
        %801 = vmatprep.subr.bf16.mxu0 0
        %802 = vmatpush1.bf16.msra.mxu0 %v783
        %803 = vmatprep.subr.bf16.mxu0 0
        %804 = vmatpush1.bf16.msra.mxu0 %v782
        %805 = vmatprep.subr.bf16.mxu0 0
        %806 = vmatpush1.bf16.msra.mxu0 %v781
        %807 = vmatprep.subr.bf16.mxu0 0
        %808 = vmatpush1.bf16.msra.mxu0 %v780
        %809 = vmatprep.subr.bf16.mxu0 0
        %810 = vmatpush1.bf16.msra.mxu0 %v779
        %811 = vmatprep.subr.bf16.mxu0 0
        %812 = vmatpush2.bf16.msra.mxu0 0
        %813 = vmatprep.subr.bf16.mxu0 0
        %814 = vmatpush2.bf16.msra.mxu0 0
        %815 = vmatprep.subr.bf16.mxu0 0
        %816 = vmatpush2.bf16.msra.mxu0 0
        %817 = vmatprep.subr.bf16.mxu0 0
        %818 = vmatpush2.bf16.msra.mxu0 0
        %819 = vmatprep.subr.bf16.mxu0 0
        %820 = vmatpush2.bf16.msra.mxu0 0
        %821 = vmatprep.subr.bf16.mxu0 0
        %822 = vmatpush2.bf16.msra.mxu0 0
        %823 = vmatprep.subr.bf16.mxu0 0
        %824 = vmatpush2.bf16.msra.mxu0 0
        %825 = vmatprep.subr.bf16.mxu0 0
        %826 = vmatpush2.bf16.msra.mxu0 0
        %827 = vmatprep.mubr.bf16.mxu0 0
        %828 = vmatmul.mubr.bf16.gmra.mxu0 %v729
        %v829 = vpop.f32.mrf.mxu0
        %v830 = vadd.f32 %v746, %v829
        %v831 = vpop.f32.mrf.mxu0
        %v832 = vpop.f32.mrf.mxu0
        %v833 = vadd.f32 %v746, %v832
        %v834 = vpop.f32.mrf.mxu0
        %835 = vdwg.mxu0
        %vm836 = vcmp.ge.f32.partialorder %v830, 0.0
        %vm837 = vcmp.ge.f32.partialorder %v833, 0.0
        %v838 = vmul.f32 %v830, 0.01
        %v839 = vmul.f32 %v833, 0.01
        %v840 = vsel %vm836, %v830, %v838
        %v841 = vsel %vm837, %v833, %v839
        %v842 = vpack.c.bf16 %v841, %v840
        %v843 = vld [vmem:[#allocation10] sm:$0xf]
        %v844 = vld [vmem:[#allocation10 + $0x4] sm:$0xf]
        %v845 = vld [vmem:[#allocation10 + $0x8] sm:$0xf]
        %v846 = vld [vmem:[#allocation10 + $0xc] sm:$0xf]
        %v847 = vld [vmem:[#allocation10 + $0x10] sm:$0xf]
        %v848 = vld [vmem:[#allocation10 + $0x14] sm:$0xf]
        %v849 = vld [vmem:[#allocation10 + $0x18] sm:$0xf]
        %v850 = vld [vmem:[#allocation10 + $0x1c] sm:$0xf]
        %v851 = vld [vmem:[#allocation10 + $0x20] sm:$0xf]
        %v852 = vld [vmem:[#allocation10 + $0x24] sm:$0xf]
        %v853 = vld [vmem:[#allocation10 + $0x28] sm:$0xf]
        %v854 = vld [vmem:[#allocation10 + $0x2c] sm:$0xf]
        %v855 = vld [vmem:[#allocation10 + $0x30] sm:$0xf]
        %v856 = vld [vmem:[#allocation10 + $0x34] sm:$0xf]
        %v857 = vld [vmem:[#allocation10 + $0x38] sm:$0xf]
        %v858 = vld [vmem:[#allocation10 + $0x3c] sm:$0xf]
        %v859 = vld [vmem:[#allocation14 + $0x3] ss:$0 sm:$0xff]
        %v876 = vunpack.c.l.b16 %v843
        %v877 = vunpack.c.l.b16 %v844
        %v878 = vunpack.c.l.b16 %v845
        %v879 = vunpack.c.l.b16 %v846
        %v880 = vunpack.c.l.b16 %v847
        %v881 = vunpack.c.l.b16 %v848
        %v882 = vunpack.c.l.b16 %v849
        %v883 = vunpack.c.l.b16 %v850
        %v884 = vunpack.c.l.b16 %v851
        %v885 = vunpack.c.l.b16 %v852
        %v886 = vunpack.c.l.b16 %v853
        %v887 = vunpack.c.l.b16 %v854
        %v888 = vunpack.c.l.b16 %v855
        %v889 = vunpack.c.l.b16 %v856
        %v890 = vunpack.c.l.b16 %v857
        %v891 = vunpack.c.l.b16 %v858
        %v892 = vpack.c.b16 %v877, %v876
        %v893 = vpack.c.b16 %v879, %v878
        %v894 = vpack.c.b16 %v881, %v880
        %v895 = vpack.c.b16 %v883, %v882
        %v896 = vpack.c.b16 %v885, %v884
        %v897 = vpack.c.b16 %v887, %v886
        %v898 = vpack.c.b16 %v889, %v888
        %v899 = vpack.c.b16 %v891, %v890
        %908 = vmatprep.subr.bf16.mxu0 0
        %909 = vmatpush1.bf16.msra.mxu0 %v899
        %910 = vmatprep.subr.bf16.mxu0 0
        %911 = vmatpush1.bf16.msra.mxu0 %v898
        %912 = vmatprep.subr.bf16.mxu0 0
        %913 = vmatpush1.bf16.msra.mxu0 %v897
        %914 = vmatprep.subr.bf16.mxu0 0
        %915 = vmatpush1.bf16.msra.mxu0 %v896
        %916 = vmatprep.subr.bf16.mxu0 0
        %917 = vmatpush1.bf16.msra.mxu0 %v895
        %918 = vmatprep.subr.bf16.mxu0 0
        %919 = vmatpush1.bf16.msra.mxu0 %v894
        %920 = vmatprep.subr.bf16.mxu0 0
        %921 = vmatpush1.bf16.msra.mxu0 %v893
        %922 = vmatprep.subr.bf16.mxu0 0
        %923 = vmatpush1.bf16.msra.mxu0 %v892
        %924 = vmatprep.subr.bf16.mxu0 0
        %925 = vmatpush2.bf16.msra.mxu0 0
        %926 = vmatprep.subr.bf16.mxu0 0
        %927 = vmatpush2.bf16.msra.mxu0 0
        %928 = vmatprep.subr.bf16.mxu0 0
        %929 = vmatpush2.bf16.msra.mxu0 0
        %930 = vmatprep.subr.bf16.mxu0 0
        %931 = vmatpush2.bf16.msra.mxu0 0
        %932 = vmatprep.subr.bf16.mxu0 0
        %933 = vmatpush2.bf16.msra.mxu0 0
        %934 = vmatprep.subr.bf16.mxu0 0
        %935 = vmatpush2.bf16.msra.mxu0 0
        %936 = vmatprep.subr.bf16.mxu0 0
        %937 = vmatpush2.bf16.msra.mxu0 0
        %938 = vmatprep.subr.bf16.mxu0 0
        %939 = vmatpush2.bf16.msra.mxu0 0
        %940 = vmatprep.mubr.bf16.mxu0 0
        %941 = vmatmul.mubr.bf16.gmra.mxu0 %v842
        %v942 = vpop.f32.mrf.mxu0
        %v943 = vadd.f32 %v859, %v942
        %v944 = vpop.f32.mrf.mxu0
        %v945 = vpop.f32.mrf.mxu0
        %v946 = vadd.f32 %v859, %v945
        %v947 = vpop.f32.mrf.mxu0
        %948 = vdwg.mxu0
        %vm949 = vcmp.ge.f32.partialorder %v943, 0.0
        %vm950 = vcmp.ge.f32.partialorder %v946, 0.0
        %v951 = vmul.f32 %v943, 0.01
        %v952 = vmul.f32 %v946, 0.01
        %v953 = vsel %vm949, %v943, %v951
        %v954 = vsel %vm950, %v946, %v952
        %v955 = vpack.c.bf16 %v954, %v953
        %v956 = vld [vmem:[#allocation11] sm:$0xf]
        %v957 = vld [vmem:[#allocation11 + $0x4] sm:$0xf]
        %v958 = vld [vmem:[#allocation11 + $0x8] sm:$0xf]
        %v959 = vld [vmem:[#allocation11 + $0xc] sm:$0xf]
        %v960 = vld [vmem:[#allocation11 + $0x10] sm:$0xf]
        %v961 = vld [vmem:[#allocation11 + $0x14] sm:$0xf]
        %v962 = vld [vmem:[#allocation11 + $0x18] sm:$0xf]
        %v963 = vld [vmem:[#allocation11 + $0x1c] sm:$0xf]
        %v964 = vld [vmem:[#allocation11 + $0x20] sm:$0xf]
        %v965 = vld [vmem:[#allocation11 + $0x24] sm:$0xf]
        %v966 = vld [vmem:[#allocation11 + $0x28] sm:$0xf]
        %v967 = vld [vmem:[#allocation11 + $0x2c] sm:$0xf]
        %v968 = vld [vmem:[#allocation11 + $0x30] sm:$0xf]
        %v969 = vld [vmem:[#allocation11 + $0x34] sm:$0xf]
        %v970 = vld [vmem:[#allocation11 + $0x38] sm:$0xf]
        %v971 = vld [vmem:[#allocation11 + $0x3c] sm:$0xf]
        %v972 = vld [vmem:[#allocation14 + $0x4] ss:$0 sm:$0xff]
        %v989 = vunpack.c.l.b16 %v956
        %v990 = vunpack.c.l.b16 %v957
        %v991 = vunpack.c.l.b16 %v958
        %v992 = vunpack.c.l.b16 %v959
        %v993 = vunpack.c.l.b16 %v960
        %v994 = vunpack.c.l.b16 %v961
        %v995 = vunpack.c.l.b16 %v962
        %v996 = vunpack.c.l.b16 %v963
        %v997 = vunpack.c.l.b16 %v964
        %v998 = vunpack.c.l.b16 %v965
        %v999 = vunpack.c.l.b16 %v966
        %v1000 = vunpack.c.l.b16 %v967
        %v1001 = vunpack.c.l.b16 %v968
        %v1002 = vunpack.c.l.b16 %v969
        %v1003 = vunpack.c.l.b16 %v970
        %v1004 = vunpack.c.l.b16 %v971
        %v1005 = vpack.c.b16 %v990, %v989
        %v1006 = vpack.c.b16 %v992, %v991
        %v1007 = vpack.c.b16 %v994, %v993
        %v1008 = vpack.c.b16 %v996, %v995
        %v1009 = vpack.c.b16 %v998, %v997
        %v1010 = vpack.c.b16 %v1000, %v999
        %v1011 = vpack.c.b16 %v1002, %v1001
        %v1012 = vpack.c.b16 %v1004, %v1003
        %1021 = vmatprep.subr.bf16.mxu0 0
        %1022 = vmatpush1.bf16.msra.mxu0 %v1012
        %1023 = vmatprep.subr.bf16.mxu0 0
        %1024 = vmatpush1.bf16.msra.mxu0 %v1011
        %1025 = vmatprep.subr.bf16.mxu0 0
        %1026 = vmatpush1.bf16.msra.mxu0 %v1010
        %1027 = vmatprep.subr.bf16.mxu0 0
        %1028 = vmatpush1.bf16.msra.mxu0 %v1009
        %1029 = vmatprep.subr.bf16.mxu0 0
        %1030 = vmatpush1.bf16.msra.mxu0 %v1008
        %1031 = vmatprep.subr.bf16.mxu0 0
        %1032 = vmatpush1.bf16.msra.mxu0 %v1007
        %1033 = vmatprep.subr.bf16.mxu0 0
        %1034 = vmatpush1.bf16.msra.mxu0 %v1006
        %1035 = vmatprep.subr.bf16.mxu0 0
        %1036 = vmatpush1.bf16.msra.mxu0 %v1005
        %1037 = vmatprep.subr.bf16.mxu0 0
        %1038 = vmatpush2.bf16.msra.mxu0 0
        %1039 = vmatprep.subr.bf16.mxu0 0
        %1040 = vmatpush2.bf16.msra.mxu0 0
        %1041 = vmatprep.subr.bf16.mxu0 0
        %1042 = vmatpush2.bf16.msra.mxu0 0
        %1043 = vmatprep.subr.bf16.mxu0 0
        %1044 = vmatpush2.bf16.msra.mxu0 0
        %1045 = vmatprep.subr.bf16.mxu0 0
        %1046 = vmatpush2.bf16.msra.mxu0 0
        %1047 = vmatprep.subr.bf16.mxu0 0
        %1048 = vmatpush2.bf16.msra.mxu0 0
        %1049 = vmatprep.subr.bf16.mxu0 0
        %1050 = vmatpush2.bf16.msra.mxu0 0
        %1051 = vmatprep.subr.bf16.mxu0 0
        %1052 = vmatpush2.bf16.msra.mxu0 0
        %1053 = vmatprep.mubr.bf16.mxu0 0
        %1054 = vmatmul.mubr.bf16.gmra.mxu0 %v955
        %v1055 = vpop.f32.mrf.mxu0
        %v1056 = vadd.f32 %v972, %v1055
        %v1057 = vpop.f32.mrf.mxu0
        %v1058 = vpop.f32.mrf.mxu0
        %v1059 = vadd.f32 %v972, %v1058
        %v1060 = vpop.f32.mrf.mxu0
        %1061 = vdwg.mxu0
        %vm1062 = vcmp.ge.f32.partialorder %v1056, 0.0
        %vm1063 = vcmp.ge.f32.partialorder %v1059, 0.0
        %v1064 = vmul.f32 %v1056, 0.01
        %v1065 = vmul.f32 %v1059, 0.01
        %v1066 = vsel %vm1062, %v1056, %v1064
        %v1067 = vsel %vm1063, %v1059, %v1065
        %v1068 = vpack.c.bf16 %v1067, %v1066
        %v1069 = vld [vmem:[#allocation13] sm:$0xff]
        %v1070 = vld [vmem:[#allocation13 + $0x8] sm:$0xff]
        %v1071 = vld [vmem:[#allocation13 + $0x10] sm:$0xff]
        %v1072 = vld [vmem:[#allocation13 + $0x18] sm:$0xff]
        %v1073 = vld [vmem:[#allocation13 + $0x20] sm:$0xff]
        %v1074 = vld [vmem:[#allocation13 + $0x28] sm:$0xff]
        %v1075 = vld [vmem:[#allocation13 + $0x30] sm:$0xff]
        %v1076 = vld [vmem:[#allocation13 + $0x38] sm:$0xff]
        %v1077 = vld [vmem:[#allocation13 + $0x40] sm:$0xff]
        %v1078 = vld [vmem:[#allocation13 + $0x48] sm:$0xff]
        %v1079 = vld [vmem:[#allocation13 + $0x50] sm:$0xff]
        %v1080 = vld [vmem:[#allocation13 + $0x58] sm:$0xff]
        %v1081 = vld [vmem:[#allocation13 + $0x60] sm:$0xff]
        %v1082 = vld [vmem:[#allocation13 + $0x68] sm:$0xff]
        %v1083 = vld [vmem:[#allocation13 + $0x70] sm:$0xff]
        %v1084 = vld [vmem:[#allocation13 + $0x78] sm:$0xff]
        %s1085 = scalar_lea.vmem [#allocation14], 5
        %v1086 = vld [vmem:[%s1085] ss:$8 sm:$0x3]
        %v1088 = vlaneseq
        %v1089 = vshrl.u32 %v1088, 7
        %v1090 = vsub.s32 0, %v1089
        %v1091 = vrot.slane %v1086, %v1090
        %v1092 = vlaneseq
        %v1093 = vshrl.u32 %v1092, 7
        %v1094 = vsub.s32 1, %v1093
        %v1095 = vrot.slane %v1086, %v1094
        %v1114 = vunpack.c.l.b16 %v1069
        %v1115 = vunpack.c.h.b16 %v1069
        %v1116 = vunpack.c.l.b16 %v1070
        %v1117 = vunpack.c.h.b16 %v1070
        %v1118 = vunpack.c.l.b16 %v1071
        %v1119 = vunpack.c.h.b16 %v1071
        %v1120 = vunpack.c.l.b16 %v1072
        %v1121 = vunpack.c.h.b16 %v1072
        %v1122 = vunpack.c.l.b16 %v1073
        %v1123 = vunpack.c.h.b16 %v1073
        %v1124 = vunpack.c.l.b16 %v1074
        %v1125 = vunpack.c.h.b16 %v1074
        %v1126 = vunpack.c.l.b16 %v1075
        %v1127 = vunpack.c.h.b16 %v1075
        %v1128 = vunpack.c.l.b16 %v1076
        %v1129 = vunpack.c.h.b16 %v1076
        %v1130 = vunpack.c.l.b16 %v1077
        %v1131 = vunpack.c.h.b16 %v1077
        %v1132 = vunpack.c.l.b16 %v1078
        %v1133 = vunpack.c.h.b16 %v1078
        %v1134 = vunpack.c.l.b16 %v1079
        %v1135 = vunpack.c.h.b16 %v1079
        %v1136 = vunpack.c.l.b16 %v1080
        %v1137 = vunpack.c.h.b16 %v1080
        %v1138 = vunpack.c.l.b16 %v1081
        %v1139 = vunpack.c.h.b16 %v1081
        %v1140 = vunpack.c.l.b16 %v1082
        %v1141 = vunpack.c.h.b16 %v1082
        %v1142 = vunpack.c.l.b16 %v1083
        %v1143 = vunpack.c.h.b16 %v1083
        %v1144 = vunpack.c.l.b16 %v1084
        %v1145 = vunpack.c.h.b16 %v1084
        %v1146 = vpack.c.b16 %v1116, %v1114
        %v1147 = vpack.c.b16 %v1117, %v1115
        %v1148 = vpack.c.b16 %v1120, %v1118
        %v1149 = vpack.c.b16 %v1121, %v1119
        %v1150 = vpack.c.b16 %v1124, %v1122
        %v1151 = vpack.c.b16 %v1125, %v1123
        %v1152 = vpack.c.b16 %v1128, %v1126
        %v1153 = vpack.c.b16 %v1129, %v1127
        %v1154 = vpack.c.b16 %v1132, %v1130
        %v1155 = vpack.c.b16 %v1133, %v1131
        %v1156 = vpack.c.b16 %v1136, %v1134
        %v1157 = vpack.c.b16 %v1137, %v1135
        %v1158 = vpack.c.b16 %v1140, %v1138
        %v1159 = vpack.c.b16 %v1141, %v1139
        %v1160 = vpack.c.b16 %v1144, %v1142
        %v1161 = vpack.c.b16 %v1145, %v1143
        %1178 = vmatprep.subr.bf16.mxu0 %v1161
        %1179 = vmatpush1.bf16.msra.mxu0 %v1160
        %1180 = vmatprep.subr.bf16.mxu0 %v1159
        %1181 = vmatpush1.bf16.msra.mxu0 %v1158
        %1182 = vmatprep.subr.bf16.mxu0 %v1157
        %1183 = vmatpush1.bf16.msra.mxu0 %v1156
        %1184 = vmatprep.subr.bf16.mxu0 %v1155
        %1185 = vmatpush1.bf16.msra.mxu0 %v1154
        %1186 = vmatprep.subr.bf16.mxu0 %v1153
        %1187 = vmatpush1.bf16.msra.mxu0 %v1152
        %1188 = vmatprep.subr.bf16.mxu0 %v1151
        %1189 = vmatpush1.bf16.msra.mxu0 %v1150
        %1190 = vmatprep.subr.bf16.mxu0 %v1149
        %1191 = vmatpush1.bf16.msra.mxu0 %v1148
        %1192 = vmatprep.subr.bf16.mxu0 %v1147
        %1193 = vmatpush1.bf16.msra.mxu0 %v1146
        %1194 = vmatprep.subr.bf16.mxu0 0
        %1195 = vmatpush2.bf16.msra.mxu0 0
        %1196 = vmatprep.subr.bf16.mxu0 0
        %1197 = vmatpush2.bf16.msra.mxu0 0
        %1198 = vmatprep.subr.bf16.mxu0 0
        %1199 = vmatpush2.bf16.msra.mxu0 0
        %1200 = vmatprep.subr.bf16.mxu0 0
        %1201 = vmatpush2.bf16.msra.mxu0 0
        %1202 = vmatprep.subr.bf16.mxu0 0
        %1203 = vmatpush2.bf16.msra.mxu0 0
        %1204 = vmatprep.subr.bf16.mxu0 0
        %1205 = vmatpush2.bf16.msra.mxu0 0
        %1206 = vmatprep.subr.bf16.mxu0 0
        %1207 = vmatpush2.bf16.msra.mxu0 0
        %1208 = vmatprep.subr.bf16.mxu0 0
        %1209 = vmatpush2.bf16.msra.mxu0 0
        %1210 = vmatprep.mubr.bf16.mxu0 0
        %1211 = vmatmul.mubr.bf16.gmra.mxu0 %v1068
        %v1212 = vpop.f32.mrf.mxu0
        %v1213 = vadd.f32 %v1091, %v1212
        %v1214 = vpop.f32.mrf.mxu0
        %v1215 = vadd.f32 %v1095, %v1214
        %v1216 = vpop.f32.mrf.mxu0
        %v1217 = vadd.f32 %v1091, %v1216
        %v1218 = vpop.f32.mrf.mxu0
        %v1219 = vadd.f32 %v1095, %v1218
        %1220 = vdwg.mxu0
        %vm1221 = vcmp.ge.f32.partialorder %v1213, 0.0
        %vm1222 = vcmp.ge.f32.partialorder %v1215, 0.0
        %vm1223 = vcmp.ge.f32.partialorder %v1217, 0.0
        %vm1224 = vcmp.ge.f32.partialorder %v1219, 0.0
        %v1225 = vmul.f32 %v1213, 0.01
        %v1226 = vmul.f32 %v1215, 0.01
        %v1227 = vmul.f32 %v1217, 0.01
        %v1228 = vmul.f32 %v1219, 0.01
        %v1229 = vsel %vm1221, %v1213, %v1225
        %v1230 = vsel %vm1222, %v1215, %v1226
        %v1231 = vsel %vm1223, %v1217, %v1227
        %v1232 = vsel %vm1224, %v1219, %v1228
        %1233 = vst [vmem:[%s424] sm:$0xff] %v1229
        %1234 = vst [vmem:[%s424 + $0x8] sm:$0xff] %v1230
        %1235 = vst [vmem:[%s424 + $0x10] sm:$0xff] %v1231
        %1236 = vst [vmem:[%s424 + $0x18] sm:$0xff] %v1232
        %s1237 = sand.u32 %s210, 1
        %s1238 = scalar_lea.sflag [#allocation4], %s1237
        %s1239 = sand.u32 %s210, 1
        %s1240 = smul.addr %s1239, 32
        %s1241 = scalar_lea.vmem [#allocation16], %s1240
        // Predicated region
        $region85: #{tpu_custom_call.1} parent=51 // pred_check
          %p1242 = pneg %p220
        $region86: #{tpu_custom_call.1} parent=51 // pred_check_branch
          %1244 = sbr.rel (%p1242) target = $region88
        $region87: #{tpu_custom_call.1} parent=51 // pred_region
          %s1245 = smul.u32 2, %s29
          %s1247 = ssub.s32 512, 512
          %1248 = vsyncadd %s1238, %s1247
          %s1249 = smul.addr %s1245, 2
          %s1250 = smul.addr %s1249, 128
          %s1251 = scalar_lea.hbm %s8, %s1250
          %s1252 = sshll.u32 %s1241, 4
          %s1253 = int_to_ptr.vmem [resolvable:$true] %s1252
          %1258 = dma.vmem_to_hbm [thread:$0]  %s1253, 512, %s1251, %s1238, 256, 256, 16
        $region88: #{tpu_custom_call.1} parent=51 // pred_fallthru
          _
      $region52: #{tpu_custom_call.1} parent=5 // pred_fallthru
        _
      %p1259 = scmp.le.s32.totalorder 2, %s24
      // Predicated region
      $region89: #{tpu_custom_call.1} parent=5 // pred_check
        %p1260 = pneg %p1259
      $region90: #{tpu_custom_call.1} parent=5 // pred_check_branch
        %1262 = sbr.rel (%p1260) target = $region92
      $region91: #{tpu_custom_call.1} parent=5 // pred_region
        %s1263 = ssub.s32 %s24, 2
        // Predicated region
        $region93: #{tpu_custom_call.1} parent=91 // pred_check
          %p1264 = pneg %p226
        $region94: #{tpu_custom_call.1} parent=91 // pred_check_branch
          %1266 = sbr.rel (%p1264) target = $region96
        $region95: #{tpu_custom_call.1} parent=91 // pred_region
          %s1267 = sand.u32 %s211, 1
          %s1268 = scalar_lea.sflag [#allocation4], %s1267
          %s1269 = sand.u32 %s211, 1
          %s1270 = smul.addr %s1269, 32
          %s1271 = scalar_lea.vmem [#allocation16], %s1270
          %1272 = dma.done %s1268, 512
        $region96: #{tpu_custom_call.1} parent=91 // pred_fallthru
          _
      $region92: #{tpu_custom_call.1} parent=5 // pred_fallthru
        _
    $region6: #{tpu_custom_call.1} parent=1 // loop_footer
      %s28 = sadd.s32 1, %s24
    $region7: #{tpu_custom_call.1} parent=1 // loop_footer_branch
      %23 = sbr.rel target = $region3
    $region8: #{tpu_custom_call.1} parent=1 // loop_exit
      _
    %1273 = vsyncpa [#allocation3], 1
    %s1274 = scalar_lea.sflag [#allocation3], 1
    %1275 = vsyncpa %s1274, 1
    %1276 = vsyncpa [#allocation6], 1
    %1277 = vsyncpa [#allocation9], 1
    %1278 = vsyncpa [#allocation12], 1
    %1279 = vsyncpa [#allocation15], 1
    %1280 = vsyncpa [#allocation4], 1
    %s1281 = scalar_lea.sflag [#allocation4], 1
    %1282 = vsyncpa %s1281, 1

</llo_original>
